<compile_context>
chip_gen: v7x
topology: tpu7x:2x2x1
jax: 0.10.0
libtpu: 0.0.40
codegen_flags: <defaults>
</compile_context>

<pallas_src>
import jax
import jax.numpy as jnp
from jax.experimental import pallas as pl
from jax.experimental.pallas import tpu as pltpu

_LANE = 128
_WB_SINGLE_BUF_BYTES = 2 << 20   # single-buffer resident weight/bias above 2 MiB


def _round_up(x, m):
    return (x + m - 1) // m * m


def _linear_kernel(x_ref, w_ref, b_ref, o_ref):
    # x_ref: (tm, F) streamed tile; w_ref: (F, tn) resident; b_ref: (1, tn);
    # o_ref: (tm, tn) with tn a multiple of 128 -> lane-dense unmasked stores.
    acc = jnp.dot(x_ref[...], w_ref[...], preferred_element_type=jnp.float32)
    o_ref[...] = (acc + b_ref[...].astype(jnp.float32)).astype(o_ref.dtype)


def prepare_params(weight, bias):
    """One-time parameter prep, hoisted out of the per-call hot path.

    weight: [out_feats, in_feats] (PyTorch nn.Linear convention); bias: [out_feats].
    Returns (w_pad [F, O_pad], b_pad [1, O_pad]).  Only the OUTPUT dim is
    zero-padded to a lane multiple (F is left unpadded); zero columns keep the
    valid output region bit-exact.  Cast weight/bias (and x) to bfloat16 around
    this call on v6e/v7x to halve HBM traffic; the kernel accumulates in f32.
    """
    O, F = weight.shape
    O_pad = _round_up(O, _LANE)
    if O_pad == O:
        return weight.T, bias.reshape(1, O)
    w_pad = jnp.zeros((F, O_pad), weight.dtype).at[:, :O].set(weight.T)
    b_pad = jnp.zeros((1, O_pad), bias.dtype).at[0, :O].set(bias)
    return w_pad, b_pad


def _vmem_capacity_bytes():
    try:
        return int(pltpu.get_tpu_info().vmem_capacity_bytes)
    except Exception:
        return 64 * 1024 * 1024   # conservative fallback (v7x per-TC size)


def _choose_tiles(M, F, O_pad, itemsize, sublane, budget):
    """Pick (tm, tn, single_buffer_wb); tn is a multiple of 128 dividing O_pad."""
    k = O_pad // _LANE
    candidates = [_LANE * d for d in range(k, 0, -1) if k % d == 0]
    for tn in candidates:
        w_block_bytes = itemsize * F * tn
        single_wb = (tn == O_pad and w_block_bytes >= _WB_SINGLE_BUF_BYTES
                     and hasattr(pl, "Buffered"))
        wb_bufs = 1 if single_wb else 2
        # weight + bias footprint (bias block pads to 8 sublanes in VMEM)
        fixed = wb_bufs * itemsize * (F * tn + 8 * tn)
        avail = budget - fixed
        if avail <= 0:
            continue
        # double-buffered x tile (tm, F) + out tile (tm, tn)
        tm_max = avail // (2 * itemsize * (F + tn))
        if tm_max >= M:
            tm = min(M, 1024)                      # full extent if M <= 1024
        else:
            tm = min(1024, (tm_max // sublane) * sublane)
            if tm < sublane:
                continue
        return tm, tn, single_wb
    # Degenerate fallback (enormous F): smallest legal tiles.
    return min(M, sublane), _LANE, False


def linear_encoder_forward(x, w_pad, b_pad, out_feats):
    """
    x:      [batch, num_nodes, in_feats]
    w_pad:  [F, O_pad]   from prepare_params
    b_pad:  [1, O_pad]   from prepare_params
    returns [batch, num_nodes, out_feats]
    """
    B, N, F = x.shape
    F_w, O_pad = w_pad.shape
    assert F_w == F, "in_feats mismatch between x and prepared weights"
    M = B * N
    itemsize = jnp.dtype(x.dtype).itemsize
    sublane = max(8, 32 // itemsize)               # 8 for f32, 16 for bf16

    # Generation-aware VMEM budget (128 MiB on v5e/v6e, 64 MiB/TC on v7x),
    # leaving headroom for Mosaic internal scratch.
    cap = _vmem_capacity_bytes()
    budget = cap - max(8 << 20, cap // 8)
    tm, tn, single_wb = _choose_tiles(M, F, O_pad, itemsize, sublane, budget)

    x2d = x.reshape(M, F)                          # free reshape: no pad, no copy
    num_i = pl.cdiv(M, tm)                         # ragged last M tile is masked
    num_j = O_pad // tn

    wb_kwargs = dict(pipeline_mode=pl.Buffered(1)) if single_wb else {}

    if num_j == 1:
        # Common case: weight + bias fully VMEM-resident across the whole grid;
        # single parallel M axis (shardable across both TensorCores on v7x).
        grid = (num_i,)
        in_specs = [
            pl.BlockSpec((tm, F), lambda i: (i, 0)),                   # streamed x
            pl.BlockSpec((F, O_pad), lambda i: (0, 0), **wb_kwargs),   # resident W^T
            pl.BlockSpec((1, O_pad), lambda i: (0, 0), **wb_kwargs),   # resident bias
        ]
        out_specs = pl.BlockSpec((tm, O_pad), lambda i: (i, 0))
        dim_sem = ("parallel",)
    else:
        # Fallback for weights that exceed the usable VMEM: tile O.  O tiles are
        # OUTERMOST so each weight column-block is DMA'd once and stays resident
        # over the inner M loop (x is re-streamed only num_j times).
        grid = (num_j, num_i)
        in_specs = [
            pl.BlockSpec((tm, F), lambda j, i: (i, 0)),
            pl.BlockSpec((F, tn), lambda j, i: (0, j)),
            pl.BlockSpec((1, tn), lambda j, i: (0, j)),
        ]
        out_specs = pl.BlockSpec((tm, tn), lambda j, i: (i, j))
        dim_sem = ("parallel", "parallel")

    wb_bufs = 1 if single_wb else 2
    vmem_needed = itemsize * (2 * tm * F + 2 * tm * tn + wb_bufs * (F * tn + 8 * tn))
    vmem_limit = min(cap - (2 << 20), max(vmem_needed + (4 << 20), 16 << 20))

    cost = pl.CostEstimate(
        flops=2 * M * F * O_pad,
        transcendentals=0,
        bytes_accessed=itemsize * (num_j * M * F + F * O_pad + M * O_pad),
    )

    # NOTE: for very small M*F the fixed pallas_call overhead dominates; callers
    # should batch several encoder invocations or bypass to plain jnp below a
    # size threshold.  On v7x, raise the streamed-x spec to pl.Buffered(3) if a
    # trace shows exposed DMA.
    out2d = pl.pallas_call(
        _linear_kernel,
        out_shape=jax.ShapeDtypeStruct((M, O_pad), x.dtype),
        grid_spec=pltpu.PrefetchScalarGridSpec(
            num_scalar_prefetch=0,
            grid=grid,
            in_specs=in_specs,
            out_specs=out_specs,
        ),
        compiler_params=pltpu.CompilerParams(
            dimension_semantics=dim_sem,
            vmem_limit_bytes=vmem_limit,
        ),
        cost_estimate=cost,
    )(x2d, w_pad, b_pad)

    if O_pad != out_feats:
        out2d = out2d[:, :out_feats]
    return out2d.reshape(B, N, out_feats)


if __name__ == "__main__":
    # Shapes implied by the module's forward: [batch, num_nodes, num_features]
    batch, num_nodes, in_feats, out_feats = 2, 8, 16, 32

    key = jax.random.PRNGKey(0)
    kx, kw, kb = jax.random.split(key, 3)

    x = jax.random.normal(kx, (batch, num_nodes, in_feats), dtype=jnp.float32)
    # Deterministic nn.Linear-like uniform(-1/sqrt(F), 1/sqrt(F)) init.
    bound = 1.0 / (in_feats ** 0.5)
    weight = jax.random.uniform(kw, (out_feats, in_feats), dtype=jnp.float32,
                                minval=-bound, maxval=bound)
    bias = jax.random.uniform(kb, (out_feats,), dtype=jnp.float32,
                              minval=-bound, maxval=bound)

    # One-time param prep (pre-transpose + O lane-padding), outside the hot path.
    w_pad, b_pad = prepare_params(weight, bias)

    fwd = jax.jit(linear_encoder_forward, static_argnums=(3,))
    out = jax.block_until_ready(fwd(x, w_pad, b_pad, out_feats))

    # Sanity check vs plain-JAX reference.
    ref = jnp.einsum("bnf,of->bno", x, weight) + bias
    assert out.shape == (batch, num_nodes, out_feats)
    assert jnp.allclose(out, ref, atol=1e-5, rtol=1e-5)

    print("KERNEL_OK")
</pallas_src>

<mosaic_0001>
module attributes {stable_mosaic.version = 11 : i64} {
  func.func @_linear_kernel(%arg0: i32, %arg1: memref<16x16xf32, #tpu.memory_space<vmem>>, %arg2: memref<16x128xf32, #tpu.memory_space<vmem>>, %arg3: memref<1x128xf32, #tpu.memory_space<vmem>>, %arg4: memref<16x128xf32, #tpu.memory_space<vmem>>) attributes {dimension_semantics = [#tpu.dimension_semantics<parallel>], iteration_bounds = array<i64: 1>, scalar_prefetch = 0 : i64, scratch_operands = 0 : i64, tpu.core_type = #tpu.core_type<tc>, window_params = [{transform_indices = @transform_0, window_bounds = array<i64: 16, 16>}, {pipeline_mode = #tpu.pipeline_mode<synchronous>, transform_indices = @transform_1, window_bounds = array<i64: 16, 128>}, {pipeline_mode = #tpu.pipeline_mode<synchronous>, transform_indices = @transform_2, window_bounds = array<i64: 1, 128>}, {transform_indices = @transform_3, window_bounds = array<i64: 16, 128>}]} {
    %c0 = arith.constant 0 : index
    %c0_0 = arith.constant 0 : index
    %0 = vector.load %arg1[%c0, %c0_0] : memref<16x16xf32, #tpu.memory_space<vmem>>, vector<16x16xf32>
    %c0_1 = arith.constant 0 : index
    %c0_2 = arith.constant 0 : index
    %1 = vector.load %arg2[%c0_1, %c0_2] : memref<16x128xf32, #tpu.memory_space<vmem>>, vector<16x128xf32>
    %cst = arith.constant dense<0.000000e+00> : vector<16x128xf32>
    %2 = tpu.matmul %0, %1, %cst {dimension_numbers = #tpu.dot_dimension_numbers<[1], [0], [0], [1], [0, 0, 1, 1], [], []>} : vector<16x16xf32>, vector<16x128xf32>, vector<16x128xf32> -> vector<16x128xf32>
    %c0_3 = arith.constant 0 : index
    %c0_4 = arith.constant 0 : index
    %3 = vector.load %arg3[%c0_3, %c0_4] : memref<1x128xf32, #tpu.memory_space<vmem>>, vector<1x128xf32>
    %4 = vector.broadcast %3 : vector<1x128xf32> to vector<16x128xf32>
    %5 = arith.addf %2, %4 : vector<16x128xf32>
    %c0_5 = arith.constant 0 : index
    %c0_6 = arith.constant 0 : index
    %6 = vector.load %arg4[%c0_5, %c0_6] : memref<16x128xf32, #tpu.memory_space<vmem>>, vector<16x128xf32>
    tpu.vector_store %arg4[%c0_5, %c0_6], %5 {strides = array<i32>} : memref<16x128xf32, #tpu.memory_space<vmem>>, vector<16x128xf32>,
    return
  }
  func.func @transform_0(%arg0: i32) -> (i32, i32) {
    %c0_i32 = arith.constant 0 : i32
    %c0_i32_0 = arith.constant 0 : i32
    return %arg0, %c0_i32 : i32, i32
  }
  func.func @transform_1(%arg0: i32) -> (i32, i32) {
    %c0_i32 = arith.constant 0 : i32
    %c0_i32_0 = arith.constant 0 : i32
    %c0_i32_1 = arith.constant 0 : i32
    return %c0_i32, %c0_i32_0 : i32, i32
  }
  func.func @transform_2(%arg0: i32) -> (i32, i32) {
    %c0_i32 = arith.constant 0 : i32
    %c0_i32_0 = arith.constant 0 : i32
    %c0_i32_1 = arith.constant 0 : i32
    return %c0_i32, %c0_i32_0 : i32, i32
  }
  func.func @transform_3(%arg0: i32) -> (i32, i32) {
    %c0_i32 = arith.constant 0 : i32
    %c0_i32_0 = arith.constant 0 : i32
    return %arg0, %c0_i32 : i32, i32
  }
}

</mosaic_0001>

<llo_original>
// kernel: linear_encoder_forward.1
$region0: #{linear_encoder_forward.1}
  #allocation0 [shape = 'u32[]', space=smem, size = 0x4, offset = 0x4, fixed_abs, tag = 'smem constant byte address 0x4 - core index']
  #allocation1 [shape = 'u32[144,128]{1,0:T(1,128)}', space=vmem, size = 0x12000, scoped, tag = 'internal scratch']
  %s0 = inlined_call_operand.hbm [shape: f32[16,16], index: 0, kind: input, shape index: {}]
  %s1 = inlined_call_operand.hbm [shape: f32[16,128], index: 1, kind: input, shape index: {}]
  %s2 = inlined_call_operand.vmem [shape: f32[1,128], index: 2, kind: input, shape index: {}]
  %s3 = inlined_call_operand.vmem [shape: f32[16,128], index: 3, kind: output, shape index: {}]
  %s4 = sld [smem:[#allocation0]]
  $region30: #{linear_encoder_forward.1} parent=0
    _
  %s6 = ssub.s32 1, %s4
  %s7 = scalar_select 0, %s6, %s4
  $region1: #{linear_encoder_forward.1} parent=0
    #allocation2 [shape = 'u8[8192]{0}', space=vmem, size = 0x2000, scoped, tag = 'input window, operand 0, single buffered']
    #allocation3 [shape = 's32[1]{0}', space=sflag, size = 0x4, scoped, tag = 'scoped memory for linear_encoder_forward.1']
    #allocation4 [shape = 'u8[8192]{0}', space=vmem, size = 0x2000, scoped, tag = 'input window, operand 1, single buffered']
    #allocation5 [shape = 's32[1]{0}', space=sflag, size = 0x4, scoped, tag = 'scoped memory for linear_encoder_forward.1']
    %8 = vsyncpa [#allocation3], 0
    %9 = vsyncpa [#allocation5], 0
    // Predicated region
    $region2: #{linear_encoder_forward.1} parent=1 // pred_check
      _
    $region3: #{linear_encoder_forward.1} parent=1 // pred_check_branch
      %11 = sbr.rel (0) target = $region5
    $region4: #{linear_encoder_forward.1} parent=1 // pred_region
      %s13 = ssub.s32 256, 256
      %14 = vsyncadd [#allocation3], %s13
      %s15 = sshll.u32 [#allocation2], 4
      %s16 = int_to_ptr.vmem [resolvable:$true] %s15
      %21 = dma.hbm_to_vmem [thread:$0]  %s0, 256, %s16, [#allocation3], 128, 128, 8
    $region5: #{linear_encoder_forward.1} parent=1 // pred_fallthru
      _
    // Predicated region
    $region6: #{linear_encoder_forward.1} parent=1 // pred_check
      _
    $region7: #{linear_encoder_forward.1} parent=1 // pred_check_branch
      %23 = sbr.rel (0) target = $region9
    $region8: #{linear_encoder_forward.1} parent=1 // pred_region
      %s25 = ssub.s32 256, 256
      %26 = vsyncadd [#allocation5], %s25
      %s27 = sshll.u32 [#allocation4], 4
      %s28 = int_to_ptr.vmem [resolvable:$true] %s27
      %33 = dma.hbm_to_vmem [thread:$0]  %s1, 256, %s28, [#allocation5], 128, 128, 8
    $region9: #{linear_encoder_forward.1} parent=1 // pred_fallthru
      _
    // Predicated region
    $region10: #{linear_encoder_forward.1} parent=1 // pred_check
      _
    $region11: #{linear_encoder_forward.1} parent=1 // pred_check_branch
      %35 = sbr.rel (0) target = $region13
    $region12: #{linear_encoder_forward.1} parent=1 // pred_region
      _
    $region13: #{linear_encoder_forward.1} parent=1 // pred_fallthru
      _
    // Predicated region
    $region14: #{linear_encoder_forward.1} parent=1 // pred_check
      _
    $region15: #{linear_encoder_forward.1} parent=1 // pred_check_branch
      %37 = sbr.rel (0) target = $region17
    $region16: #{linear_encoder_forward.1} parent=1 // pred_region
      %38 = dma.done [#allocation3], 256
    $region17: #{linear_encoder_forward.1} parent=1 // pred_fallthru
      _
    // Predicated region
    $region18: #{linear_encoder_forward.1} parent=1 // pred_check
      _
    $region19: #{linear_encoder_forward.1} parent=1 // pred_check_branch
      %40 = sbr.rel (0) target = $region21
    $region20: #{linear_encoder_forward.1} parent=1 // pred_region
      %41 = dma.done [#allocation5], 256
    $region21: #{linear_encoder_forward.1} parent=1 // pred_fallthru
      _
    %v42 = vld [vmem:[#allocation2] sm:$0xff]
    %v43 = vld [vmem:[#allocation2 + $0x8] sm:$0xff]
    %v44 = vld [vmem:[#allocation4] sm:$0xff]
    %v45 = vld [vmem:[#allocation4 + $0x8] sm:$0xff]
    %v46 = vld [vmem:[%s2] sm:$0x1]
    %v48 = vlaneseq
    %v49 = vshrl.u32 %v48, 7
    %v50 = vsub.s32 0, %v49
    %v51 = vrot.slane %v46, %v50
    %vm53 = vcmask 130048
    %v55 = vsel %vm53, %v42, 0
    %v58 = vsel %vm53, %v43, 0
    %60 = vmatprep.subr.mxu0 0.0
    %61 = vmatpush1.msra.mxu0 %v44
    %62 = vmatprep.subr.mxu0 0.0
    %63 = vmatpush1.msra.mxu0 %v45
    %64 = vmatprep.subr.mxu0 0.0
    %65 = vmatpush1.msra.mxu0 0.0
    %66 = vmatprep.subr.mxu0 0.0
    %67 = vmatpush1.msra.mxu0 0.0
    %68 = vmatprep.subr.mxu0 0.0
    %69 = vmatpush1.msra.mxu0 0.0
    %70 = vmatprep.subr.mxu0 0.0
    %71 = vmatpush1.msra.mxu0 0.0
    %72 = vmatprep.subr.mxu0 0.0
    %73 = vmatpush1.msra.mxu0 0.0
    %74 = vmatprep.subr.mxu0 0.0
    %75 = vmatpush1.msra.mxu0 0.0
    %76 = vmatprep.subr.mxu0 0.0
    %77 = vmatpush1.msra.mxu0 0.0
    %78 = vmatprep.subr.mxu0 0.0
    %79 = vmatpush1.msra.mxu0 0.0
    %80 = vmatprep.subr.mxu0 0.0
    %81 = vmatpush1.msra.mxu0 0.0
    %82 = vmatprep.subr.mxu0 0.0
    %83 = vmatpush1.msra.mxu0 0.0
    %84 = vmatprep.subr.mxu0 0.0
    %85 = vmatpush1.msra.mxu0 0.0
    %86 = vmatprep.subr.mxu0 0.0
    %87 = vmatpush1.msra.mxu0 0.0
    %88 = vmatprep.subr.mxu0 0.0
    %89 = vmatpush1.msra.mxu0 0.0
    %90 = vmatprep.subr.mxu0 0.0
    %91 = vmatpush1.msra.mxu0 0.0
    %92 = vmatprep.subr.mxu0 0.0
    %93 = vmatpush1.msra.mxu0 0.0
    %94 = vmatprep.subr.mxu0 0.0
    %95 = vmatpush1.msra.mxu0 0.0
    %96 = vmatprep.subr.mxu0 0.0
    %97 = vmatpush1.msra.mxu0 0.0
    %98 = vmatprep.subr.mxu0 0.0
    %99 = vmatpush1.msra.mxu0 0.0
    %100 = vmatprep.subr.mxu0 0.0
    %101 = vmatpush1.msra.mxu0 0.0
    %102 = vmatprep.subr.mxu0 0.0
    %103 = vmatpush1.msra.mxu0 0.0
    %104 = vmatprep.subr.mxu0 0.0
    %105 = vmatpush1.msra.mxu0 0.0
    %106 = vmatprep.subr.mxu0 0.0
    %107 = vmatpush1.msra.mxu0 0.0
    %108 = vmatprep.subr.mxu0 0.0
    %109 = vmatpush1.msra.mxu0 0.0
    %110 = vmatprep.subr.mxu0 0.0
    %111 = vmatpush1.msra.mxu0 0.0
    %112 = vmatprep.subr.mxu0 0.0
    %113 = vmatpush1.msra.mxu0 0.0
    %114 = vmatprep.subr.mxu0 0.0
    %115 = vmatpush1.msra.mxu0 0.0
    %116 = vmatprep.subr.mxu0 0.0
    %117 = vmatpush1.msra.mxu0 0.0
    %118 = vmatprep.subr.mxu0 0.0
    %119 = vmatpush1.msra.mxu0 0.0
    %120 = vmatprep.subr.mxu0 0.0
    %121 = vmatpush1.msra.mxu0 0.0
    %122 = vmatprep.subr.mxu0 0.0
    %123 = vmatpush1.msra.mxu0 0.0
    %124 = vmatprep.mubr.f32.mxu0 0.0
    %125 = vmatmul.mubr.f32.gmra.mrb[0].mxu0 %v55
    %v126 = vpop.f32.mrb[0].mxu0
    %v127 = vadd.f32 %v51, %v126
    %v128 = vpop.f32.mrb[0].mxu0
    %129 = vmatprep.mubr.f32.mxu0 0.0
    %130 = vmatmul.mubr.f32.gmra.mrb[0].mxu0 %v58
    %v131 = vpop.f32.mrb[0].mxu0
    %v132 = vadd.f32 %v51, %v131
    %v133 = vpop.f32.mrb[0].mxu0
    %134 = vdwg.mxu0
    %135 = vst [vmem:[%s3] sm:$0xff] %v127
    %136 = vst [vmem:[%s3 + $0x8] sm:$0xff] %v132
    // Predicated region
    $region22: #{linear_encoder_forward.1} parent=1 // pred_check
      _
    $region23: #{linear_encoder_forward.1} parent=1 // pred_check_branch
      %138 = sbr.rel (0) target = $region25
    $region24: #{linear_encoder_forward.1} parent=1 // pred_region
      _
    $region25: #{linear_encoder_forward.1} parent=1 // pred_fallthru
      _
    // Predicated region
    $region26: #{linear_encoder_forward.1} parent=1 // pred_check
      _
    $region27: #{linear_encoder_forward.1} parent=1 // pred_check_branch
      %140 = sbr.rel (0) target = $region29
    $region28: #{linear_encoder_forward.1} parent=1 // pred_region
      _
    $region29: #{linear_encoder_forward.1} parent=1 // pred_fallthru
      _
    %141 = vsyncpa [#allocation3], 1
    %142 = vsyncpa [#allocation5], 1

</llo_original>
